<compile_context>
chip_gen: v7x
topology: tpu7x:2x2x1
jax: 0.10.0
libtpu: 0.0.40
codegen_flags: <defaults>
</compile_context>

<pallas_src>
import functools

import numpy as np
import jax
import jax.numpy as jnp
from jax.experimental import pallas as pl
from jax.experimental.pallas import tpu as pltpu

M_MARGIN = 0.5   # ArcB(m=0.5); `s` is unused by the original forward.

_VMEM_BUDGET_BYTES = 40 * 1024 * 1024   # tile-selection budget (fits v7x's 64 MiB VMEM)
_VMEM_LIMIT_BYTES = 56 * 1024 * 1024    # raised scoped-VMEM limit (default 16/32 MiB)


def _round_up(x, m):
    return (x + m - 1) // m * m


def _choose_tile_n(N, D, C, itemsize, budget=_VMEM_BUDGET_BYTES):
    """Largest row tile whose double-buffered streams + resident w.T + f32 temps fit."""
    def est(tn):
        streamed = 2 * tn * (D + C) * itemsize          # emb + classes tiles (double-buffered)
        resident = 2 * D * C * itemsize                 # w.T (constant index_map; DMA'd once)
        temps = tn * C * 4 * 6 + tn * D * 4             # f32 elementwise temporaries
        return streamed + resident + temps
    tn = min(1024, _round_up(N, 8))
    while tn > 8 and est(tn) > budget:
        tn = max(8, _round_up(tn // 2, 8))
    return tn


def _arcb_kernel(ssw_ref, cls_ref, emb_ref, wt_ref, out_ref, *,
                 n_valid, tile_n, cos_m, sin_m, mask_last):
    i = pl.program_id(0)

    e = emb_ref[...]                                   # (tn, D)  bf16
    y = cls_ref[...].astype(jnp.float32)               # (tn, C)  f32

    # logits = emb @ w.T on the MXU (bf16 operands, f32 accumulation).
    logits = jnp.dot(e, wt_ref[...], preferred_element_type=jnp.float32)   # (tn, C)

    # scale^2 = ||w||_F^2 * ||e_i||_2^2 ; ||w||^2 is hoisted and read from SMEM.
    ef = e.astype(jnp.float32)
    sumsq_e = jnp.sum(ef * ef, axis=1, keepdims=True)  # (tn, 1)
    sp = ssw_ref[0] * sumsq_e                          # (tn, 1)

    # y*scale*cos(t+m) + (1-y)*scale*cos(t-m)
    #   == logits*cos_m + (1-2y)*sin_m*sqrt(max(scale^2 - logits^2, 0))   (exact identity)
    # NOTE: rounding cases where |cos_t| would marginally exceed 1 are clamped here,
    # where the torch reference's acos would NaN (deliberate divergence, as before).
    sin_term = jnp.sqrt(jnp.maximum(sp - logits * logits, 0.0))            # (tn, C)
    outs = logits * cos_m + (1.0 - 2.0 * y) * sin_m * sin_term

    # BCEWithLogits, numerically stable: max(x,0) - x*y + log(1 + exp(-|x|))
    bce = (jnp.maximum(outs, 0.0) - outs * y
           + jnp.log(1.0 + jnp.exp(-jnp.abs(outs))))

    def _write(b):
        # Per-tile partial sum over the sublane (row) axis only; full reduce + mean
        # happen outside the kernel on the tiny (grid, 1, C) partials array.
        out_ref[...] = jnp.sum(b, axis=0, keepdims=True)[None]            # (1, 1, C)

    if mask_last:
        last = pl.num_programs(0) - 1

        @pl.when(i != last)
        def _():
            _write(bce)

        @pl.when(i == last)
        def _():
            row = i * tile_n + jax.lax.broadcasted_iota(jnp.int32, (tile_n, 1), 0)
            _write(jnp.where(row < n_valid, bce, 0.0))
    else:
        _write(bce)


def arcb_loss(outputs, classes, emb, ids, w, m=M_MARGIN, *,
              stream_dtype=jnp.bfloat16, tile_n=None):
    """ArcB.forward. `outputs` and `ids` are accepted for interface parity but are not used
    by the original forward (only classes, emb and w are). emb/classes/w are streamed in
    `stream_dtype` (bf16 default: half the HBM bytes, native MXU rate; 0/1 labels are exact).
    Pass stream_dtype=jnp.float32 for full-f32 streaming (e.g. soft labels)."""
    del outputs, ids  # unused by ArcB.forward
    N, D = emb.shape
    C = w.shape[0]

    y_s = classes.reshape(N, C).astype(stream_dtype)
    e_s = emb.astype(stream_dtype)
    wt_s = w.astype(stream_dtype).T                    # (D, C): one-time wrapper transpose

    # Grid-invariant ||w||_F^2 (of the streamed/quantized weights, so it is consistent
    # with the in-kernel matmul), hoisted out of the kernel; delivered via scalar prefetch.
    wf = wt_s.astype(jnp.float32)
    sumsq_w = jnp.sum(wf * wf).reshape(1)

    itemsize = jnp.dtype(stream_dtype).itemsize
    if tile_n is None:
        tile_n = _choose_tile_n(N, D, C, itemsize)
    grid = pl.cdiv(N, tile_n)
    mask_last = (N % tile_n) != 0

    kernel = functools.partial(
        _arcb_kernel,
        n_valid=N,
        tile_n=tile_n,
        cos_m=float(np.cos(m)),
        sin_m=float(np.sin(m)),
        mask_last=mask_last,
    )

    partials = pl.pallas_call(
        kernel,
        out_shape=jax.ShapeDtypeStruct((grid, 1, C), jnp.float32),
        grid_spec=pltpu.PrefetchScalarGridSpec(
            num_scalar_prefetch=1,                     # sumsq_w -> SMEM
            grid=(grid,),
            in_specs=[
                pl.BlockSpec((tile_n, C), lambda i, ssw: (i, 0)),   # classes tile
                pl.BlockSpec((tile_n, D), lambda i, ssw: (i, 0)),   # emb tile
                pl.BlockSpec((D, C), lambda i, ssw: (0, 0)),        # w.T (resident)
            ],
            out_specs=pl.BlockSpec((1, 1, C), lambda i, ssw: (i, 0, 0)),
        ),
        compiler_params=pltpu.CompilerParams(
            dimension_semantics=("parallel",),         # independent tiles -> both TCs on v7x
            vmem_limit_bytes=_VMEM_LIMIT_BYTES),
    )(sumsq_w, y_s, e_s, wt_s)

    return jnp.sum(partials) / (N * C)


def ref_arcb(outputs, classes, emb, ids, w, m=M_MARGIN):
    """Numpy reference reproducing the PyTorch forward (float64, uses acos/cos directly)."""
    del outputs, ids
    y = np.asarray(classes, np.float64)
    e = np.asarray(emb, np.float64)
    w = np.asarray(w, np.float64)

    scale = np.linalg.norm(w) * np.linalg.norm(e, axis=1)
    scale = scale[:, None]                                # (N, 1)
    theta = np.arccos(e @ w.T / scale)                    # (N, C)
    outs = y * scale * np.cos(theta + m) + (1.0 - y) * scale * np.cos(theta - m)

    bce = np.maximum(outs, 0.0) - outs * y + np.log1p(np.exp(-np.abs(outs)))
    return float(np.mean(bce))


if __name__ == "__main__":
    key = jax.random.PRNGKey(0)
    k1, k2, k3, k4, k5 = jax.random.split(key, 5)

    N, D, C = 8, 32, 4
    outputs = jax.random.normal(k1, (N, C), dtype=jnp.float32)        # unused by forward
    classes = jax.random.bernoulli(k2, 0.5, (N, C)).astype(jnp.float32)
    emb = jax.random.normal(k3, (N, D), dtype=jnp.float32)
    ids = jax.random.randint(k4, (N,), 0, 3, dtype=jnp.int32)         # unused by forward
    w = jax.random.normal(k5, (C, D), dtype=jnp.float32)              # net's last parameter

    loss = arcb_loss(outputs, classes, emb, ids, w, m=M_MARGIN)
    loss = jax.block_until_ready(loss)

    # Compare against the f64 reference evaluated on the same bf16-quantized operands the
    # kernel streams, so only f32-vs-f64 rounding remains in the comparison.
    q = lambda x: np.asarray(jnp.asarray(x).astype(jnp.bfloat16).astype(jnp.float32))
    ref = ref_arcb(np.array(outputs), q(classes), q(emb), np.array(ids), q(w), m=M_MARGIN)
    assert abs(float(loss) - ref) < 2e-3 * max(1.0, abs(ref)), (float(loss), ref)
    print("KERNEL_OK")
</pallas_src>

<mosaic_0001>
module attributes {stable_mosaic.version = 11 : i64} {
  func.func @_arcb_kernel(%arg0: i32, %arg1: memref<1xf32, #tpu.memory_space<smem>>, %arg2: memref<8x4xbf16, #tpu.memory_space<vmem>>, %arg3: memref<8x32xbf16, #tpu.memory_space<vmem>>, %arg4: memref<32x4xbf16, #tpu.memory_space<vmem>>, %arg5: memref<1x1x4xf32, #tpu.memory_space<vmem>>) attributes {dimension_semantics = [#tpu.dimension_semantics<parallel>], iteration_bounds = array<i64: 1>, scalar_prefetch = 1 : i64, scratch_operands = 0 : i64, tpu.core_type = #tpu.core_type<tc>, window_params = [{transform_indices = @transform_0, window_bounds = array<i64: 8, 4>}, {transform_indices = @transform_1, window_bounds = array<i64: 8, 32>}, {pipeline_mode = #tpu.pipeline_mode<synchronous>, transform_indices = @transform_2, window_bounds = array<i64: 32, 4>}, {transform_indices = @transform_3, window_bounds = array<i64: 1, 1, 4>}]} {
    %c0 = arith.constant 0 : index
    %c0_0 = arith.constant 0 : index
    %0 = vector.load %arg3[%c0, %c0_0] : memref<8x32xbf16, #tpu.memory_space<vmem>>, vector<8x32xbf16>
    %c0_1 = arith.constant 0 : index
    %c0_2 = arith.constant 0 : index
    %1 = vector.load %arg2[%c0_1, %c0_2] : memref<8x4xbf16, #tpu.memory_space<vmem>>, vector<8x4xbf16>
    %2 = arith.extf %1 : vector<8x4xbf16> to vector<8x4xf32>
    %c0_3 = arith.constant 0 : index
    %c0_4 = arith.constant 0 : index
    %3 = vector.load %arg4[%c0_3, %c0_4] : memref<32x4xbf16, #tpu.memory_space<vmem>>, vector<32x4xbf16>
    %cst = arith.constant dense<0.000000e+00> : vector<8x4xf32>
    %4 = tpu.matmul %0, %3, %cst {dimension_numbers = #tpu.dot_dimension_numbers<[1], [0], [0], [1], [0, 0, 1, 1], [], []>} : vector<8x32xbf16>, vector<32x4xbf16>, vector<8x4xf32> -> vector<8x4xf32>
    %5 = arith.extf %0 : vector<8x32xbf16> to vector<8x32xf32>
    %6 = arith.mulf %5, %5 : vector<8x32xf32>
    %cst_5 = arith.constant dense<0.000000e+00> : vector<8xf32>
    %7 = vector.multi_reduction <add>, %6, %cst_5 [1] : vector<8x32xf32> to vector<8xf32>
    %8 = vector.shape_cast %7 : vector<8xf32> to vector<8x1xf32>
    %c0_6 = arith.constant 0 : index
    %9 = memref.load %arg1[%c0_6] : memref<1xf32, #tpu.memory_space<smem>>
    %10 = vector.broadcast %9 : f32 to vector<8x1xf32>
    %11 = arith.mulf %10, %8 : vector<8x1xf32>
    %12 = arith.mulf %4, %4 : vector<8x4xf32>
    %13 = vector.broadcast %11 : vector<8x1xf32> to vector<8x4xf32>
    %14 = arith.subf %13, %12 : vector<8x4xf32>
    %cst_7 = arith.constant 0.000000e+00 : f32
    %15 = vector.broadcast %cst_7 : f32 to vector<8x4xf32>
    %16 = arith.maximumf %14, %15 : vector<8x4xf32>
    %17 = math.sqrt %16 : vector<8x4xf32>
    %cst_8 = arith.constant 0.87758255 : f32
    %18 = vector.broadcast %cst_8 : f32 to vector<8x4xf32>
    %19 = arith.mulf %4, %18 : vector<8x4xf32>
    %cst_9 = arith.constant 2.000000e+00 : f32
    %20 = vector.broadcast %cst_9 : f32 to vector<8x4xf32>
    %21 = arith.mulf %20, %2 : vector<8x4xf32>
    %cst_10 = arith.constant 1.000000e+00 : f32
    %22 = vector.broadcast %cst_10 : f32 to vector<8x4xf32>
    %23 = arith.subf %22, %21 : vector<8x4xf32>
    %cst_11 = arith.constant 0.47942555 : f32
    %24 = vector.broadcast %cst_11 : f32 to vector<8x4xf32>
    %25 = arith.mulf %23, %24 : vector<8x4xf32>
    %26 = arith.mulf %25, %17 : vector<8x4xf32>
    %27 = arith.addf %19, %26 : vector<8x4xf32>
    %cst_12 = arith.constant 0.000000e+00 : f32
    %28 = vector.broadcast %cst_12 : f32 to vector<8x4xf32>
    %29 = arith.maximumf %27, %28 : vector<8x4xf32>
    %30 = arith.mulf %27, %2 : vector<8x4xf32>
    %31 = arith.subf %29, %30 : vector<8x4xf32>
    %32 = math.absf %27 : vector<8x4xf32>
    %cst_13 = arith.constant 0.000000e+00 : f32
    %33 = vector.broadcast %cst_13 : f32 to vector<8x4xf32>
    %34 = arith.subf %33, %32 : vector<8x4xf32>
    %35 = math.exp %34 : vector<8x4xf32>
    %cst_14 = arith.constant 1.000000e+00 : f32
    %36 = vector.broadcast %cst_14 : f32 to vector<8x4xf32>
    %37 = arith.addf %36, %35 : vector<8x4xf32>
    %38 = math.log %37 : vector<8x4xf32>
    %39 = arith.addf %31, %38 : vector<8x4xf32>
    %cst_15 = arith.constant dense<0.000000e+00> : vector<4xf32>
    %40 = vector.multi_reduction <add>, %39, %cst_15 [0] : vector<8x4xf32> to vector<4xf32>
    %41 = vector.shape_cast %40 : vector<4xf32> to vector<1x4xf32>
    %42 = vector.shape_cast %41 : vector<1x4xf32> to vector<1x1x4xf32>
    %c0_16 = arith.constant 0 : index
    %c0_17 = arith.constant 0 : index
    %c0_18 = arith.constant 0 : index
    %43 = vector.load %arg5[%c0_16, %c0_17, %c0_18] : memref<1x1x4xf32, #tpu.memory_space<vmem>>, vector<1x1x4xf32>
    tpu.vector_store %arg5[%c0_16, %c0_17, %c0_18], %42 {strides = array<i32>} : memref<1x1x4xf32, #tpu.memory_space<vmem>>, vector<1x1x4xf32>,
    return
  }
  func.func @transform_0(%arg0: i32, %arg1: memref<1xf32, #tpu.memory_space<smem>>) -> (i32, i32) {
    %c0_i32 = arith.constant 0 : i32
    %c0_i32_0 = arith.constant 0 : i32
    return %arg0, %c0_i32 : i32, i32
  }
  func.func @transform_1(%arg0: i32, %arg1: memref<1xf32, #tpu.memory_space<smem>>) -> (i32, i32) {
    %c0_i32 = arith.constant 0 : i32
    %c0_i32_0 = arith.constant 0 : i32
    return %arg0, %c0_i32 : i32, i32
  }
  func.func @transform_2(%arg0: i32, %arg1: memref<1xf32, #tpu.memory_space<smem>>) -> (i32, i32) {
    %c0_i32 = arith.constant 0 : i32
    %c0_i32_0 = arith.constant 0 : i32
    %c0_i32_1 = arith.constant 0 : i32
    return %c0_i32, %c0_i32_0 : i32, i32
  }
  func.func @transform_3(%arg0: i32, %arg1: memref<1xf32, #tpu.memory_space<smem>>) -> (i32, i32, i32) {
    %c0_i32 = arith.constant 0 : i32
    %c0_i32_0 = arith.constant 0 : i32
    %c0_i32_1 = arith.constant 0 : i32
    return %arg0, %c0_i32, %c0_i32_0 : i32, i32, i32
  }
}

</mosaic_0001>

<llo_original>
// kernel: tpu_custom_call.1
$region0: #{tpu_custom_call.1}
  #allocation0 [shape = 'u32[]', space=smem, size = 0x4, offset = 0x4, fixed_abs, tag = 'smem constant byte address 0x4 - core index']
  #allocation1 [shape = 'u32[144,128]{1,0:T(1,128)}', space=vmem, size = 0x12000, scoped, tag = 'internal scratch']
  #allocation2 [shape = 's32[1]{0}', space=sflag, size = 0x4, scoped, tag = 'scoped memory for tpu_custom_call.1']
  #allocation3 [shape = 'f32[1]{0:T(128)S(6)}', space=smem, size = 0x200, scoped, tag = 'prefetched SMEM operand 0']
  %s0 = inlined_call_operand.<no memory space> [shape: f32[1], index: 0, kind: input, shape index: {}]
  %s1 = inlined_call_operand.vmem [shape: bf16[8,4], index: 1, kind: input, shape index: {}]
  %s2 = inlined_call_operand.vmem [shape: bf16[8,32], index: 2, kind: input, shape index: {}]
  %s3 = inlined_call_operand.vmem [shape: bf16[32,4], index: 3, kind: input, shape index: {}]
  %s4 = inlined_call_operand.hbm [shape: f32[1,1,4], index: 4, kind: output, shape index: {}]
  %s5 = sld [smem:[#allocation0]]
  $region22: #{tpu_custom_call.1} parent=0
    _
  %s7 = ssub.s32 1, %s5
  %s8 = scalar_select 0, %s7, %s5
  %9 = sst [smem:[#allocation3]] %s0
  $region1: #{tpu_custom_call.1} parent=0
    #allocation4 [shape = 'u8[512]{0}', space=vmem, size = 0x400, scoped, tag = 'output window, operand 0, single buffered']
    #allocation5 [shape = 's32[1]{0}', space=sflag, size = 0x4, scoped, tag = 'scoped memory for tpu_custom_call.1']
    %10 = vsyncpa [#allocation5], 0
    // Predicated region
    $region2: #{tpu_custom_call.1} parent=1 // pred_check
      _
    $region3: #{tpu_custom_call.1} parent=1 // pred_check_branch
      %12 = sbr.rel (0) target = $region5
    $region4: #{tpu_custom_call.1} parent=1 // pred_region
      _
    $region5: #{tpu_custom_call.1} parent=1 // pred_fallthru
      _
    // Predicated region
    $region6: #{tpu_custom_call.1} parent=1 // pred_check
      _
    $region7: #{tpu_custom_call.1} parent=1 // pred_check_branch
      %14 = sbr.rel (0) target = $region9
    $region8: #{tpu_custom_call.1} parent=1 // pred_region
      _
    $region9: #{tpu_custom_call.1} parent=1 // pred_fallthru
      _
    // Predicated region
    $region10: #{tpu_custom_call.1} parent=1 // pred_check
      _
    $region11: #{tpu_custom_call.1} parent=1 // pred_check_branch
      %16 = sbr.rel (0) target = $region13
    $region12: #{tpu_custom_call.1} parent=1 // pred_region
      _
    $region13: #{tpu_custom_call.1} parent=1 // pred_fallthru
      _
    %v18 = vld [vmem:[%s2] sm:$0xf]
    %v19 = vld [vmem:[%s1] sm:$0xf]
    %v20 = vunpack.c.l.bf16 %v19
    %v21 = vld [vmem:[%s3] sm:$0xf]
    %v22 = vld [vmem:[%s3 + $0x4] sm:$0xf]
    %v23 = vld [vmem:[%s3 + $0x8] sm:$0xf]
    %v24 = vld [vmem:[%s3 + $0xc] sm:$0xf]
    %v29 = vunpack.c.l.b16 %v21
    %v30 = vunpack.c.l.b16 %v22
    %v31 = vunpack.c.l.b16 %v23
    %v32 = vunpack.c.l.b16 %v24
    %v33 = vpack.c.b16 %v30, %v29
    %v34 = vpack.c.b16 %v32, %v31
    %vm37 = vcmask 261120
    %v39 = vsel %vm37, %v18, 0
    %41 = vmatprep.subr.bf16.mxu0 0
    %42 = vmatpush1.bf16.msra.mxu0 %v33
    %43 = vmatprep.subr.bf16.mxu0 0
    %44 = vmatpush1.bf16.msra.mxu0 %v34
    %45 = vmatprep.subr.bf16.mxu0 0
    %46 = vmatpush1.bf16.msra.mxu0 0
    %47 = vmatprep.subr.bf16.mxu0 0
    %48 = vmatpush1.bf16.msra.mxu0 0
    %49 = vmatprep.subr.bf16.mxu0 0
    %50 = vmatpush1.bf16.msra.mxu0 0
    %51 = vmatprep.subr.bf16.mxu0 0
    %52 = vmatpush1.bf16.msra.mxu0 0
    %53 = vmatprep.subr.bf16.mxu0 0
    %54 = vmatpush1.bf16.msra.mxu0 0
    %55 = vmatprep.subr.bf16.mxu0 0
    %56 = vmatpush1.bf16.msra.mxu0 0
    %57 = vmatprep.subr.bf16.mxu0 0
    %58 = vmatpush1.bf16.msra.mxu0 0
    %59 = vmatprep.subr.bf16.mxu0 0
    %60 = vmatpush1.bf16.msra.mxu0 0
    %61 = vmatprep.subr.bf16.mxu0 0
    %62 = vmatpush1.bf16.msra.mxu0 0
    %63 = vmatprep.subr.bf16.mxu0 0
    %64 = vmatpush1.bf16.msra.mxu0 0
    %65 = vmatprep.subr.bf16.mxu0 0
    %66 = vmatpush1.bf16.msra.mxu0 0
    %67 = vmatprep.subr.bf16.mxu0 0
    %68 = vmatpush1.bf16.msra.mxu0 0
    %69 = vmatprep.subr.bf16.mxu0 0
    %70 = vmatpush1.bf16.msra.mxu0 0
    %71 = vmatprep.subr.bf16.mxu0 0
    %72 = vmatpush1.bf16.msra.mxu0 0
    %73 = vmatprep.mubr.bf16.mxu0 0
    %74 = vmatmul.mubr.bf16.gmra.mrb[0].mxu0 %v39
    %v75 = vpop.f32.mrb[0].mxu0
    %v76 = vadd.f32 0.0, %v75
    %v77 = vpop.f32.mrb[0].mxu0
    %v78 = vpop.f32.mrb[0].mxu0
    %v79 = vpop.f32.mrb[0].mxu0
    %80 = vdwg.mxu0
    %v81 = vunpack.c.l.bf16 %v18
    %v82 = vmul.f32 %v81, %v81
    %v83 = vsel %vm37, %v82, 0.0
    %84 = vadd.xlane.f32.xlu0 %v83
    %v85 = vpop.xlane.xlu0 %84
    %s86 = sld [smem:[#allocation3]]
    %v87 = vstv %s86
    %v88 = vmul.f32 %v87, %v85
    %v89 = vmul.f32 %v76, %v76
    %v90 = vsub.f32 %v88, %v89
    %v91 = vmax.f32 %v90, 0.0
    %v92 = vrsqrt.pop %v91
    %v93 = vmul.f32 %v91, %v92
    %vm94 = vcmp.eq.f32.partialorder %v91, inf
    %v95 = vsel %vm94, %v91, %v93
    %vm96 = vcmp.eq.f32.partialorder %v91, 0.0
    %v97 = vand.u32 %v91, 2147483648
    %v98 = vsel %vm96, %v97, %v95
    %v99 = vmul.f32 %v76, 0.87758255
    %v100 = vmul.f32 %v20, 2.0
    %v101 = vsub.f32 1.0, %v100
    %v102 = vmul.f32 %v101, 0.47942555
    %v103 = vmul.f32 %v102, %v98
    %v104 = vadd.f32 %v99, %v103
    %v105 = vmax.f32 %v104, 0.0
    %v106 = vmul.f32 %v104, %v20
    %v107 = vsub.f32 %v105, %v106
    %v108 = vand.u32 2147483647, %v104
    %v109 = vsub.f32 0.0, %v108
    %v110 = vmul.f32 %v109, 1.442695
    %v111 = vpow.pop %v110
    %v112 = vadd.f32 %v111, 1.0
    %v113 = vlog2.pop %v112
    %v114 = vmul.f32 %v113, 0.6931472
    %v115 = vadd.f32 %v107, %v114
    %vm116 = vcmask 31744
    %v117 = vsel %vm116, %v115, 0.0
    %v118 = vrot.slane %v117, 4
    %v119 = vadd.f32 %v117, %v118
    %v120 = vrot.slane %v119, 2
    %v121 = vadd.f32 %v119, %v120
    %v122 = vrot.slane %v121, 1
    %v123 = vadd.f32 %v121, %v122
    %vm124 = vcmask 24576
    %125 = vst.msk [vmem:[#allocation4] sm:$0x1] %vm124, %v123
    // Predicated region
    $region14: #{tpu_custom_call.1} parent=1 // pred_check
      _
    $region15: #{tpu_custom_call.1} parent=1 // pred_check_branch
      %127 = sbr.rel (0) target = $region17
    $region16: #{tpu_custom_call.1} parent=1 // pred_region
      %s129 = ssub.s32 16, 16
      %130 = vsyncadd [#allocation5], %s129
      %s132 = sshll.u32 [#allocation4], 4
      %s133 = int_to_ptr.vmem [resolvable:$true] %s132
      %135 = dma.vmem_to_hbm [thread:$0]  %s133, 16, %s4, [#allocation5]
    $region17: #{tpu_custom_call.1} parent=1 // pred_fallthru
      _
    // Predicated region
    $region18: #{tpu_custom_call.1} parent=1 // pred_check
      _
    $region19: #{tpu_custom_call.1} parent=1 // pred_check_branch
      %137 = sbr.rel (0) target = $region21
    $region20: #{tpu_custom_call.1} parent=1 // pred_region
      %138 = dma.done [#allocation5], 16
    $region21: #{tpu_custom_call.1} parent=1 // pred_fallthru
      _
    %139 = vsyncpa [#allocation5], 1

</llo_original>
